<compile_context>
chip_gen: v7x
topology: tpu7x:2x2x1
jax: 0.10.0
libtpu: 0.0.40
codegen_flags: <defaults>
</compile_context>

<pallas_src>
import functools

import jax
import jax.numpy as jnp
from jax.experimental import pallas as pl
from jax.experimental.pallas import tpu as pltpu


def _gn_kernel(x_ref, n_ref, o_ref, *, stddev):
    """x_ref / n_ref / o_ref: (TM, LANE) tiles.  y = x + noise * stddev."""
    o_ref[...] = (
        x_ref[...].astype(jnp.float32)
        + n_ref[...].astype(jnp.float32) * stddev
    ).astype(o_ref.dtype)


def _round_up(v, m):
    return ((v + m - 1) // m) * m


def gaussian_noise(x, seed, stddev=5.0, training=True, *, lane=1024, block_rows=512):
    """Forward pass of GaussianNoise.  x: any-shape float tensor."""
    if not training:
        return x

    assert lane % 128 == 0, "lane (last block dim) must be a multiple of 128"
    assert block_rows % 8 == 0, "block_rows must be a multiple of 8"

    orig_shape = x.shape
    total = x.size
    flat = x.reshape(-1)

    # Lane-dense 2-D slab: (rows, lane), rows padded to a multiple of the tile
    # height (itself a multiple of 8) so every block is (8,128)-aligned.
    n_rows = pl.cdiv(total, lane)
    tm = min(block_rows, _round_up(n_rows, 8))
    n_rows_pad = _round_up(n_rows, tm)
    padded_total = n_rows_pad * lane
    if padded_total != total:
        flat = jnp.pad(flat, (0, padded_total - total))
    x2d = flat.reshape(n_rows_pad, lane)

    # Noise exactly as in torch.randn_like(x) * stddev (scaling done in-kernel).
    noise2d = jax.random.normal(
        jax.random.PRNGKey(seed), (n_rows_pad, lane), dtype=jnp.float32
    )

    grid = (n_rows_pad // tm,)
    out_shape = jax.ShapeDtypeStruct((n_rows_pad, lane), x.dtype)

    out2d = pl.pallas_call(
        functools.partial(_gn_kernel, stddev=float(stddev)),
        out_shape=out_shape,
        grid_spec=pltpu.PrefetchScalarGridSpec(
            num_scalar_prefetch=0,
            grid=grid,
            in_specs=[
                pl.BlockSpec((tm, lane), lambda i: (i, 0)),
                pl.BlockSpec((tm, lane), lambda i: (i, 0)),
            ],
            out_specs=pl.BlockSpec((tm, lane), lambda i: (i, 0)),
        ),
        compiler_params=pltpu.CompilerParams(
            dimension_semantics=("parallel",),   # lets v7x use both TensorCores
            vmem_limit_bytes=32 * 1024 * 1024,   # tiles stay well under this
        ),
    )(x2d, noise2d)

    return out2d.reshape(-1)[:total].reshape(orig_shape)


if __name__ == "__main__":
    STDDEV = 5.0
    key = jax.random.PRNGKey(0)
    x = jax.random.normal(key, (2, 4, 16, 16), dtype=jnp.float32)

    # Training mode: default lane-dense tiling (single grid step at this size).
    out = gaussian_noise(x, seed=1234, stddev=STDDEV, training=True)
    out = jax.block_until_ready(out)
    assert out.shape == x.shape and out.dtype == x.dtype
    diff = out - x
    m, s = float(jnp.mean(diff)), float(jnp.std(diff))
    assert abs(m) < 1.0, f"noise mean {m} too far from 0"
    assert 3.0 < s < 7.0, f"noise std {s} too far from {STDDEV}"

    # Training mode again with tiny tiles to exercise a multi-step pipelined grid.
    out2 = gaussian_noise(x, seed=7, stddev=STDDEV, training=True,
                          lane=128, block_rows=8)
    out2 = jax.block_until_ready(out2)
    diff2 = out2 - x
    m2, s2 = float(jnp.mean(diff2)), float(jnp.std(diff2))
    assert abs(m2) < 1.0, f"noise mean {m2} too far from 0"
    assert 3.0 < s2 < 7.0, f"noise std {s2} too far from {STDDEV}"

    # Eval mode: identity.
    out_eval = gaussian_noise(x, seed=1234, stddev=STDDEV, training=False)
    assert jnp.array_equal(out_eval, x)

    print("KERNEL_OK")
</pallas_src>

<mosaic_0001>
module attributes {stable_mosaic.version = 11 : i64} {
  func.func @_gn_kernel(%arg0: i32, %arg1: memref<8x1024xf32, #tpu.memory_space<vmem>>, %arg2: memref<8x1024xf32, #tpu.memory_space<vmem>>, %arg3: memref<8x1024xf32, #tpu.memory_space<vmem>>) attributes {dimension_semantics = [#tpu.dimension_semantics<parallel>], iteration_bounds = array<i64: 1>, scalar_prefetch = 0 : i64, scratch_operands = 0 : i64, tpu.core_type = #tpu.core_type<tc>, window_params = [{transform_indices = @transform_0, window_bounds = array<i64: 8, 1024>}, {transform_indices = @transform_1, window_bounds = array<i64: 8, 1024>}, {transform_indices = @transform_2, window_bounds = array<i64: 8, 1024>}]} {
    %c0 = arith.constant 0 : index
    %c0_0 = arith.constant 0 : index
    %0 = vector.load %arg1[%c0, %c0_0] : memref<8x1024xf32, #tpu.memory_space<vmem>>, vector<8x1024xf32>
    %c0_1 = arith.constant 0 : index
    %c0_2 = arith.constant 0 : index
    %1 = vector.load %arg2[%c0_1, %c0_2] : memref<8x1024xf32, #tpu.memory_space<vmem>>, vector<8x1024xf32>
    %cst = arith.constant 5.000000e+00 : f32
    %2 = vector.broadcast %cst : f32 to vector<8x1024xf32>
    %3 = arith.mulf %1, %2 : vector<8x1024xf32>
    %4 = arith.addf %0, %3 : vector<8x1024xf32>
    %c0_3 = arith.constant 0 : index
    %c0_4 = arith.constant 0 : index
    %5 = vector.load %arg3[%c0_3, %c0_4] : memref<8x1024xf32, #tpu.memory_space<vmem>>, vector<8x1024xf32>
    tpu.vector_store %arg3[%c0_3, %c0_4], %4 {strides = array<i32>} : memref<8x1024xf32, #tpu.memory_space<vmem>>, vector<8x1024xf32>,
    return
  }
  func.func @transform_0(%arg0: i32) -> (i32, i32) {
    %c0_i32 = arith.constant 0 : i32
    %c0_i32_0 = arith.constant 0 : i32
    return %arg0, %c0_i32 : i32, i32
  }
  func.func @transform_1(%arg0: i32) -> (i32, i32) {
    %c0_i32 = arith.constant 0 : i32
    %c0_i32_0 = arith.constant 0 : i32
    return %arg0, %c0_i32 : i32, i32
  }
  func.func @transform_2(%arg0: i32) -> (i32, i32) {
    %c0_i32 = arith.constant 0 : i32
    %c0_i32_0 = arith.constant 0 : i32
    return %arg0, %c0_i32 : i32, i32
  }
}

</mosaic_0001>

<llo_original>
// kernel: tpu_custom_call.1
$region0: #{tpu_custom_call.1}
  #allocation0 [shape = 'u32[]', space=smem, size = 0x4, offset = 0x4, fixed_abs, tag = 'smem constant byte address 0x4 - core index']
  #allocation1 [shape = 'u32[144,128]{1,0:T(1,128)}', space=vmem, size = 0x12000, scoped, tag = 'internal scratch']
  %s0 = inlined_call_operand.hbm [shape: f32[8,1024], index: 0, kind: input, shape index: {}]
  %s1 = inlined_call_operand.hbm [shape: f32[8,1024], index: 1, kind: input, shape index: {}]
  %s2 = inlined_call_operand.hbm [shape: f32[8,1024], index: 2, kind: output, shape index: {}]
  %s3 = sld [smem:[#allocation0]]
  $region26: #{tpu_custom_call.1} parent=0
    _
  %s5 = ssub.s32 1, %s3
  %s6 = scalar_select 0, %s5, %s3
  $region1: #{tpu_custom_call.1} parent=0
    #allocation2 [shape = 'u8[32768]{0}', space=vmem, size = 0x8000, scoped, tag = 'input window, operand 0, single buffered']
    #allocation3 [shape = 's32[1]{0}', space=sflag, size = 0x4, scoped, tag = 'scoped memory for tpu_custom_call.1']
    #allocation4 [shape = 's32[1]{0}', space=sflag, size = 0x4, scoped, tag = 'scoped memory for tpu_custom_call.1']
    #allocation5 [shape = 'u8[32768]{0}', space=vmem, size = 0x8000, scoped, tag = 'input window, operand 1, single buffered']
    #allocation6 [shape = 's32[1]{0}', space=sflag, size = 0x4, scoped, tag = 'scoped memory for tpu_custom_call.1']
    #allocation7 [shape = 'u8[32768]{0}', space=vmem, size = 0x8000, scoped, tag = 'output window, operand 0, single buffered']
    %7 = vsyncpa [#allocation3], 0
    %8 = vsyncpa [#allocation6], 0
    %9 = vsyncpa [#allocation4], 0
    // Predicated region
    $region2: #{tpu_custom_call.1} parent=1 // pred_check
      _
    $region3: #{tpu_custom_call.1} parent=1 // pred_check_branch
      %11 = sbr.rel (0) target = $region5
    $region4: #{tpu_custom_call.1} parent=1 // pred_region
      %s13 = ssub.s32 1024, 1024
      %14 = vsyncadd [#allocation3], %s13
      %s16 = sshll.u32 [#allocation2], 4
      %s17 = int_to_ptr.vmem [resolvable:$true] %s16
      %19 = dma.hbm_to_vmem [thread:$0]  %s0, 1024, %s17, [#allocation3]
    $region5: #{tpu_custom_call.1} parent=1 // pred_fallthru
      _
    // Predicated region
    $region6: #{tpu_custom_call.1} parent=1 // pred_check
      _
    $region7: #{tpu_custom_call.1} parent=1 // pred_check_branch
      %21 = sbr.rel (0) target = $region9
    $region8: #{tpu_custom_call.1} parent=1 // pred_region
      %s23 = ssub.s32 1024, 1024
      %24 = vsyncadd [#allocation6], %s23
      %s26 = sshll.u32 [#allocation5], 4
      %s27 = int_to_ptr.vmem [resolvable:$true] %s26
      %29 = dma.hbm_to_vmem [thread:$0]  %s1, 1024, %s27, [#allocation6]
    $region9: #{tpu_custom_call.1} parent=1 // pred_fallthru
      _
    // Predicated region
    $region10: #{tpu_custom_call.1} parent=1 // pred_check
      _
    $region11: #{tpu_custom_call.1} parent=1 // pred_check_branch
      %31 = sbr.rel (0) target = $region13
    $region12: #{tpu_custom_call.1} parent=1 // pred_region
      %32 = dma.done [#allocation3], 1024
    $region13: #{tpu_custom_call.1} parent=1 // pred_fallthru
      _
    // Predicated region
    $region14: #{tpu_custom_call.1} parent=1 // pred_check
      _
    $region15: #{tpu_custom_call.1} parent=1 // pred_check_branch
      %34 = sbr.rel (0) target = $region17
    $region16: #{tpu_custom_call.1} parent=1 // pred_region
      %35 = dma.done [#allocation6], 1024
    $region17: #{tpu_custom_call.1} parent=1 // pred_fallthru
      _
    %v36 = vld [vmem:[#allocation2] sm:$0xff]
    %v37 = vld [vmem:[#allocation2 + $0x8] sm:$0xff]
    %v38 = vld [vmem:[#allocation2 + $0x10] sm:$0xff]
    %v39 = vld [vmem:[#allocation2 + $0x18] sm:$0xff]
    %v40 = vld [vmem:[#allocation2 + $0x20] sm:$0xff]
    %v41 = vld [vmem:[#allocation2 + $0x28] sm:$0xff]
    %v42 = vld [vmem:[#allocation2 + $0x30] sm:$0xff]
    %v43 = vld [vmem:[#allocation2 + $0x38] sm:$0xff]
    %v44 = vld [vmem:[#allocation5] sm:$0xff]
    %v45 = vld [vmem:[#allocation5 + $0x8] sm:$0xff]
    %v46 = vld [vmem:[#allocation5 + $0x10] sm:$0xff]
    %v47 = vld [vmem:[#allocation5 + $0x18] sm:$0xff]
    %v48 = vld [vmem:[#allocation5 + $0x20] sm:$0xff]
    %v49 = vld [vmem:[#allocation5 + $0x28] sm:$0xff]
    %v50 = vld [vmem:[#allocation5 + $0x30] sm:$0xff]
    %v51 = vld [vmem:[#allocation5 + $0x38] sm:$0xff]
    %v52 = vmul.f32 %v44, 5.0
    %v53 = vmul.f32 %v45, 5.0
    %v54 = vmul.f32 %v46, 5.0
    %v55 = vmul.f32 %v47, 5.0
    %v56 = vmul.f32 %v48, 5.0
    %v57 = vmul.f32 %v49, 5.0
    %v58 = vmul.f32 %v50, 5.0
    %v59 = vmul.f32 %v51, 5.0
    %v60 = vadd.f32 %v36, %v52
    %v61 = vadd.f32 %v37, %v53
    %v62 = vadd.f32 %v38, %v54
    %v63 = vadd.f32 %v39, %v55
    %v64 = vadd.f32 %v40, %v56
    %v65 = vadd.f32 %v41, %v57
    %v66 = vadd.f32 %v42, %v58
    %v67 = vadd.f32 %v43, %v59
    %68 = vst [vmem:[#allocation7] sm:$0xff] %v60
    %69 = vst [vmem:[#allocation7 + $0x8] sm:$0xff] %v61
    %70 = vst [vmem:[#allocation7 + $0x10] sm:$0xff] %v62
    %71 = vst [vmem:[#allocation7 + $0x18] sm:$0xff] %v63
    %72 = vst [vmem:[#allocation7 + $0x20] sm:$0xff] %v64
    %73 = vst [vmem:[#allocation7 + $0x28] sm:$0xff] %v65
    %74 = vst [vmem:[#allocation7 + $0x30] sm:$0xff] %v66
    %75 = vst [vmem:[#allocation7 + $0x38] sm:$0xff] %v67
    // Predicated region
    $region18: #{tpu_custom_call.1} parent=1 // pred_check
      _
    $region19: #{tpu_custom_call.1} parent=1 // pred_check_branch
      %77 = sbr.rel (0) target = $region21
    $region20: #{tpu_custom_call.1} parent=1 // pred_region
      %s79 = ssub.s32 1024, 1024
      %80 = vsyncadd [#allocation4], %s79
      %s82 = sshll.u32 [#allocation7], 4
      %s83 = int_to_ptr.vmem [resolvable:$true] %s82
      %85 = dma.vmem_to_hbm [thread:$0]  %s83, 1024, %s2, [#allocation4]
    $region21: #{tpu_custom_call.1} parent=1 // pred_fallthru
      _
    // Predicated region
    $region22: #{tpu_custom_call.1} parent=1 // pred_check
      _
    $region23: #{tpu_custom_call.1} parent=1 // pred_check_branch
      %87 = sbr.rel (0) target = $region25
    $region24: #{tpu_custom_call.1} parent=1 // pred_region
      %88 = dma.done [#allocation4], 1024
    $region25: #{tpu_custom_call.1} parent=1 // pred_fallthru
      _
    %89 = vsyncpa [#allocation3], 1
    %90 = vsyncpa [#allocation6], 1
    %91 = vsyncpa [#allocation4], 1

</llo_original>
